<compile_context>
chip_gen: v6e
topology: v6e:2x2x1
jax: 0.10.0
libtpu: 0.0.40
codegen_flags: <defaults>
</compile_context>

<pallas_src>
import jax
import jax.numpy as jnp
import numpy as np
from jax import lax
from jax.experimental import pallas as pl
from jax.experimental.pallas import tpu as pltpu


def _softplus(v):
    # numerically stable softplus (same formula in kernel and reference)
    return jnp.log1p(jnp.exp(-jnp.abs(v))) + jnp.maximum(v, 0.0)


def _mish(v):
    return v * jnp.tanh(_softplus(v))


def conv1d_block_kernel(x_ref, w_ref, b_ref, out_ref):
    block_b, T, c_in = x_ref.shape
    k_cin, c_out = w_ref.shape
    ksize = k_cin // c_in
    pad = (ksize - 1) // 2            # 'same' padding (StyleSpeech Conv1d default)
    n = block_b * T

    # Flatten (batch, time) onto the sublane axis; channels stay on lanes.
    x = x_ref[...].reshape(n, c_in)
    t_idx = lax.broadcasted_iota(jnp.int32, (n, 1), 0) % T

    # im2col: one shifted copy per tap via sublane roll + boundary mask, then a
    # single (n, ksize*c_in) @ (ksize*c_in, c_out) MXU matmul.
    cols = []
    for k in range(ksize):                         # static unroll over taps
        d = k - pad                                # temporal offset of this tap
        if d == 0:
            shifted = x
        else:
            shifted = pltpu.roll(x, shift=(-d) % n, axis=0)   # row g -> x[g + d]
        valid = jnp.logical_and(t_idx + d >= 0, t_idx + d < T)  # stay inside own sequence
        cols.append(jnp.where(valid, shifted, 0.0))
    im2col = jnp.concatenate(cols, axis=1)         # (n, ksize*c_in)

    acc = jnp.dot(im2col.astype(jnp.bfloat16), w_ref[...],
                  preferred_element_type=jnp.float32) + b_ref[...]
    out_ref[...] = _mish(acc).reshape(block_b, T, c_out)


def conv1d_block(x, weight, bias, *, block_b=4):
    """Conv1DBlock forward (inference).

    x:      (B, T, Cin)  float32
    weight: (Cout, Cin, K)  PyTorch nn.Conv1d layout
    bias:   (Cout,)
    returns (B, T, Cout)  float32
    """
    B, T, c_in = x.shape
    c_out, c_in_w, ksize = weight.shape
    assert c_in_w == c_in
    assert ksize % 2 == 1, "'same' padding assumes an odd kernel size"

    block_b = min(block_b, B)
    while B % block_b:
        block_b -= 1

    # (Cout, Cin, K) -> (K, Cin, Cout) -> (K*Cin, Cout); bf16 MXU operand.
    w2d = jnp.transpose(weight, (2, 1, 0)).reshape(ksize * c_in, c_out)
    w2d = w2d.astype(jnp.bfloat16)
    b2d = bias.reshape(1, c_out).astype(jnp.float32)

    return pl.pallas_call(
        conv1d_block_kernel,
        out_shape=jax.ShapeDtypeStruct((B, T, c_out), jnp.float32),
        grid=(B // block_b,),
        in_specs=[
            pl.BlockSpec((block_b, T, c_in), lambda b: (b, 0, 0)),
            pl.BlockSpec((ksize * c_in, c_out), lambda b: (0, 0)),
            pl.BlockSpec((1, c_out), lambda b: (0, 0)),
        ],
        out_specs=pl.BlockSpec((block_b, T, c_out), lambda b: (b, 0, 0)),
        compiler_params=pltpu.CompilerParams(dimension_semantics=("parallel",)),
    )(x, w2d, b2d)


def conv1d_block_ref(x, weight, bias):
    """Pure-JAX f32 reference mirroring the PyTorch forward (eval mode)."""
    B, T, c_in = x.shape
    c_out, _, ksize = weight.shape
    pad = (ksize - 1) // 2
    xp = jnp.pad(x, ((0, 0), (pad, pad), (0, 0)))
    w = jnp.transpose(weight, (2, 1, 0))           # (K, Cin, Cout)
    conv = sum(jnp.einsum('bti,io->bto', xp[:, k:k + T, :], w[k])
               for k in range(ksize)) + bias
    return _mish(conv)                              # dropout = identity at inference


if __name__ == "__main__":
    key = jax.random.PRNGKey(0)
    kx, kw, kb = jax.random.split(key, 3)

    B, T, C_IN, C_OUT, K = 8, 16, 32, 64, 5
    x = jax.random.normal(kx, (B, T, C_IN), dtype=jnp.float32)
    weight = 0.1 * jax.random.normal(kw, (C_OUT, C_IN, K), dtype=jnp.float32)
    bias = 0.1 * jax.random.normal(kb, (C_OUT,), dtype=jnp.float32)

    out = conv1d_block(x, weight, bias, block_b=4)
    out = jax.block_until_ready(out)

    ref = conv1d_block_ref(x, weight, bias)
    np.testing.assert_allclose(np.asarray(out), np.asarray(ref), rtol=2e-2, atol=2e-2)

    print("KERNEL_OK")
</pallas_src>

<mosaic_0001>
module attributes {stable_mosaic.version = 11 : i64} {
  func.func @conv1d_block_kernel(%arg0: i32, %arg1: memref<4x16x32xf32, #tpu.memory_space<vmem>>, %arg2: memref<160x64xbf16, #tpu.memory_space<vmem>>, %arg3: memref<1x64xf32, #tpu.memory_space<vmem>>, %arg4: memref<4x16x64xf32, #tpu.memory_space<vmem>>) attributes {dimension_semantics = [#tpu.dimension_semantics<parallel>], iteration_bounds = array<i64: 2>, scalar_prefetch = 0 : i64, scratch_operands = 0 : i64, tpu.core_type = #tpu.core_type<tc>, window_params = [{transform_indices = @transform_0, window_bounds = array<i64: 4, 16, 32>}, {pipeline_mode = #tpu.pipeline_mode<synchronous>, transform_indices = @transform_1, window_bounds = array<i64: 160, 64>}, {pipeline_mode = #tpu.pipeline_mode<synchronous>, transform_indices = @transform_2, window_bounds = array<i64: 1, 64>}, {transform_indices = @transform_3, window_bounds = array<i64: 4, 16, 64>}]} {
    %c0 = arith.constant 0 : index
    %c0_0 = arith.constant 0 : index
    %c0_1 = arith.constant 0 : index
    %0 = vector.load %arg1[%c0, %c0_0, %c0_1] : memref<4x16x32xf32, #tpu.memory_space<vmem>>, vector<4x16x32xf32>
    %1 = vector.shape_cast %0 : vector<4x16x32xf32> to vector<64x32xf32>
    %2 = tpu.iota {dimensions = array<i32: 0>} : vector<64x1xi32>
    %c16_i32 = arith.constant 16 : i32
    %c0_i32 = arith.constant 0 : i32
    %3 = arith.cmpi eq, %c16_i32, %c0_i32 : i32
    %c1_i32 = arith.constant 1 : i32
    %4 = arith.select %3, %c1_i32, %c16_i32 : i32
    %5 = vector.broadcast %4 : i32 to vector<64x1xi32>
    %6 = arith.remsi %2, %5 : vector<64x1xi32>
    %c0_i32_2 = arith.constant 0 : i32
    %7 = vector.broadcast %c0_i32_2 : i32 to vector<64x1xi32>
    %8 = arith.cmpi ne, %6, %7 : vector<64x1xi32>
    %c0_i32_3 = arith.constant 0 : i32
    %9 = vector.broadcast %c0_i32_3 : i32 to vector<64x1xi32>
    %10 = arith.cmpi slt, %6, %9 : vector<64x1xi32>
    %c0_i32_4 = arith.constant 0 : i32
    %11 = arith.cmpi slt, %4, %c0_i32_4 : i32
    %12 = vector.broadcast %11 : i1 to vector<64x1xi1>
    %13 = vector.broadcast %12 : vector<64x1xi1> to vector<64x1xi1>
    %14 = arith.xori %10, %13 : vector<64x1xi1>
    %15 = arith.andi %14, %8 : vector<64x1xi1>
    %16 = vector.broadcast %4 : i32 to vector<64x1xi32>
    %17 = arith.addi %6, %16 : vector<64x1xi32>
    %18 = arith.select %15, %17, %6 : vector<64x1xi1>, vector<64x1xi32>
    %c2_i32 = arith.constant 2 : i32
    %19 = tpu.dynamic_rotate %1 by %c2_i32 dim 0 : vector<64x32xf32>, i32 -> vector<64x32xf32>
    %c-2_i32 = arith.constant -2 : i32
    %20 = vector.broadcast %c-2_i32 : i32 to vector<64x1xi32>
    %21 = arith.addi %18, %20 : vector<64x1xi32>
    %c0_i32_5 = arith.constant 0 : i32
    %22 = vector.broadcast %c0_i32_5 : i32 to vector<64x1xi32>
    %23 = arith.cmpi sge, %21, %22 : vector<64x1xi32>
    %c-2_i32_6 = arith.constant -2 : i32
    %24 = vector.broadcast %c-2_i32_6 : i32 to vector<64x1xi32>
    %25 = arith.addi %18, %24 : vector<64x1xi32>
    %c16_i32_7 = arith.constant 16 : i32
    %26 = vector.broadcast %c16_i32_7 : i32 to vector<64x1xi32>
    %27 = arith.cmpi slt, %25, %26 : vector<64x1xi32>
    %28 = arith.andi %23, %27 : vector<64x1xi1>
    %cst = arith.constant 0.000000e+00 : f32
    %29 = vector.shape_cast %28 : vector<64x1xi1> to vector<64x1xi1>
    %30 = vector.broadcast %29 : vector<64x1xi1> to vector<64x32xi1>
    %31 = vector.broadcast %cst : f32 to vector<64x32xf32>
    %32 = arith.select %30, %19, %31 : vector<64x32xi1>, vector<64x32xf32>
    %c1_i32_8 = arith.constant 1 : i32
    %33 = tpu.dynamic_rotate %1 by %c1_i32_8 dim 0 : vector<64x32xf32>, i32 -> vector<64x32xf32>
    %c-1_i32 = arith.constant -1 : i32
    %34 = vector.broadcast %c-1_i32 : i32 to vector<64x1xi32>
    %35 = arith.addi %18, %34 : vector<64x1xi32>
    %c0_i32_9 = arith.constant 0 : i32
    %36 = vector.broadcast %c0_i32_9 : i32 to vector<64x1xi32>
    %37 = arith.cmpi sge, %35, %36 : vector<64x1xi32>
    %c-1_i32_10 = arith.constant -1 : i32
    %38 = vector.broadcast %c-1_i32_10 : i32 to vector<64x1xi32>
    %39 = arith.addi %18, %38 : vector<64x1xi32>
    %c16_i32_11 = arith.constant 16 : i32
    %40 = vector.broadcast %c16_i32_11 : i32 to vector<64x1xi32>
    %41 = arith.cmpi slt, %39, %40 : vector<64x1xi32>
    %42 = arith.andi %37, %41 : vector<64x1xi1>
    %cst_12 = arith.constant 0.000000e+00 : f32
    %43 = vector.shape_cast %42 : vector<64x1xi1> to vector<64x1xi1>
    %44 = vector.broadcast %43 : vector<64x1xi1> to vector<64x32xi1>
    %45 = vector.broadcast %cst_12 : f32 to vector<64x32xf32>
    %46 = arith.select %44, %33, %45 : vector<64x32xi1>, vector<64x32xf32>
    %c0_i32_13 = arith.constant 0 : i32
    %47 = vector.broadcast %c0_i32_13 : i32 to vector<64x1xi32>
    %48 = arith.addi %18, %47 : vector<64x1xi32>
    %c0_i32_14 = arith.constant 0 : i32
    %49 = vector.broadcast %c0_i32_14 : i32 to vector<64x1xi32>
    %50 = arith.cmpi sge, %48, %49 : vector<64x1xi32>
    %c0_i32_15 = arith.constant 0 : i32
    %51 = vector.broadcast %c0_i32_15 : i32 to vector<64x1xi32>
    %52 = arith.addi %18, %51 : vector<64x1xi32>
    %c16_i32_16 = arith.constant 16 : i32
    %53 = vector.broadcast %c16_i32_16 : i32 to vector<64x1xi32>
    %54 = arith.cmpi slt, %52, %53 : vector<64x1xi32>
    %55 = arith.andi %50, %54 : vector<64x1xi1>
    %cst_17 = arith.constant 0.000000e+00 : f32
    %56 = vector.shape_cast %55 : vector<64x1xi1> to vector<64x1xi1>
    %57 = vector.broadcast %56 : vector<64x1xi1> to vector<64x32xi1>
    %58 = vector.broadcast %cst_17 : f32 to vector<64x32xf32>
    %59 = arith.select %57, %1, %58 : vector<64x32xi1>, vector<64x32xf32>
    %c63_i32 = arith.constant 63 : i32
    %60 = tpu.dynamic_rotate %1 by %c63_i32 dim 0 : vector<64x32xf32>, i32 -> vector<64x32xf32>
    %c1_i32_18 = arith.constant 1 : i32
    %61 = vector.broadcast %c1_i32_18 : i32 to vector<64x1xi32>
    %62 = arith.addi %18, %61 : vector<64x1xi32>
    %c0_i32_19 = arith.constant 0 : i32
    %63 = vector.broadcast %c0_i32_19 : i32 to vector<64x1xi32>
    %64 = arith.cmpi sge, %62, %63 : vector<64x1xi32>
    %c1_i32_20 = arith.constant 1 : i32
    %65 = vector.broadcast %c1_i32_20 : i32 to vector<64x1xi32>
    %66 = arith.addi %18, %65 : vector<64x1xi32>
    %c16_i32_21 = arith.constant 16 : i32
    %67 = vector.broadcast %c16_i32_21 : i32 to vector<64x1xi32>
    %68 = arith.cmpi slt, %66, %67 : vector<64x1xi32>
    %69 = arith.andi %64, %68 : vector<64x1xi1>
    %cst_22 = arith.constant 0.000000e+00 : f32
    %70 = vector.shape_cast %69 : vector<64x1xi1> to vector<64x1xi1>
    %71 = vector.broadcast %70 : vector<64x1xi1> to vector<64x32xi1>
    %72 = vector.broadcast %cst_22 : f32 to vector<64x32xf32>
    %73 = arith.select %71, %60, %72 : vector<64x32xi1>, vector<64x32xf32>
    %c62_i32 = arith.constant 62 : i32
    %74 = tpu.dynamic_rotate %1 by %c62_i32 dim 0 : vector<64x32xf32>, i32 -> vector<64x32xf32>
    %c2_i32_23 = arith.constant 2 : i32
    %75 = vector.broadcast %c2_i32_23 : i32 to vector<64x1xi32>
    %76 = arith.addi %18, %75 : vector<64x1xi32>
    %c0_i32_24 = arith.constant 0 : i32
    %77 = vector.broadcast %c0_i32_24 : i32 to vector<64x1xi32>
    %78 = arith.cmpi sge, %76, %77 : vector<64x1xi32>
    %c2_i32_25 = arith.constant 2 : i32
    %79 = vector.broadcast %c2_i32_25 : i32 to vector<64x1xi32>
    %80 = arith.addi %18, %79 : vector<64x1xi32>
    %c16_i32_26 = arith.constant 16 : i32
    %81 = vector.broadcast %c16_i32_26 : i32 to vector<64x1xi32>
    %82 = arith.cmpi slt, %80, %81 : vector<64x1xi32>
    %83 = arith.andi %78, %82 : vector<64x1xi1>
    %cst_27 = arith.constant 0.000000e+00 : f32
    %84 = vector.shape_cast %83 : vector<64x1xi1> to vector<64x1xi1>
    %85 = vector.broadcast %84 : vector<64x1xi1> to vector<64x32xi1>
    %86 = vector.broadcast %cst_27 : f32 to vector<64x32xf32>
    %87 = arith.select %85, %74, %86 : vector<64x32xi1>, vector<64x32xf32>
    %88 = tpu.concatenate %32, %46, %59, %73, %87 in 1 : vector<64x32xf32>, vector<64x32xf32>, vector<64x32xf32>, vector<64x32xf32>, vector<64x32xf32> -> vector<64x160xf32>
    %89 = arith.truncf %88 : vector<64x160xf32> to vector<64x160xbf16>
    %c0_28 = arith.constant 0 : index
    %c0_29 = arith.constant 0 : index
    %90 = vector.load %arg2[%c0_28, %c0_29] : memref<160x64xbf16, #tpu.memory_space<vmem>>, vector<160x64xbf16>
    %cst_30 = arith.constant dense<0.000000e+00> : vector<64x64xf32>
    %91 = tpu.matmul %89, %90, %cst_30 {dimension_numbers = #tpu.dot_dimension_numbers<[1], [0], [0], [1], [0, 0, 1, 1], [], []>} : vector<64x160xbf16>, vector<160x64xbf16>, vector<64x64xf32> -> vector<64x64xf32>
    %c0_31 = arith.constant 0 : index
    %c0_32 = arith.constant 0 : index
    %92 = vector.load %arg3[%c0_31, %c0_32] : memref<1x64xf32, #tpu.memory_space<vmem>>, vector<1x64xf32>
    %93 = vector.broadcast %92 : vector<1x64xf32> to vector<64x64xf32>
    %94 = arith.addf %91, %93 : vector<64x64xf32>
    %95 = math.absf %94 : vector<64x64xf32>
    %cst_33 = arith.constant 0.000000e+00 : f32
    %96 = vector.broadcast %cst_33 : f32 to vector<64x64xf32>
    %97 = arith.subf %96, %95 : vector<64x64xf32>
    %98 = math.exp %97 : vector<64x64xf32>
    %99 = math.log1p %98 : vector<64x64xf32>
    %cst_34 = arith.constant 0.000000e+00 : f32
    %100 = vector.broadcast %cst_34 : f32 to vector<64x64xf32>
    %101 = arith.maximumf %94, %100 : vector<64x64xf32>
    %102 = arith.addf %99, %101 : vector<64x64xf32>
    %103 = math.tanh %102 : vector<64x64xf32>
    %104 = arith.mulf %94, %103 : vector<64x64xf32>
    %105 = vector.shape_cast %104 : vector<64x64xf32> to vector<4x16x64xf32>
    %c0_35 = arith.constant 0 : index
    %c0_36 = arith.constant 0 : index
    %c0_37 = arith.constant 0 : index
    %106 = vector.load %arg4[%c0_35, %c0_36, %c0_37] : memref<4x16x64xf32, #tpu.memory_space<vmem>>, vector<4x16x64xf32>
    tpu.vector_store %arg4[%c0_35, %c0_36, %c0_37], %105 {strides = array<i32>} : memref<4x16x64xf32, #tpu.memory_space<vmem>>, vector<4x16x64xf32>,
    return
  }
  func.func @transform_0(%arg0: i32) -> (i32, i32, i32) {
    %c0_i32 = arith.constant 0 : i32
    %c0_i32_0 = arith.constant 0 : i32
    %c0_i32_1 = arith.constant 0 : i32
    return %arg0, %c0_i32, %c0_i32_0 : i32, i32, i32
  }
  func.func @transform_1(%arg0: i32) -> (i32, i32) {
    %c0_i32 = arith.constant 0 : i32
    %c0_i32_0 = arith.constant 0 : i32
    %c0_i32_1 = arith.constant 0 : i32
    return %c0_i32, %c0_i32_0 : i32, i32
  }
  func.func @transform_2(%arg0: i32) -> (i32, i32) {
    %c0_i32 = arith.constant 0 : i32
    %c0_i32_0 = arith.constant 0 : i32
    %c0_i32_1 = arith.constant 0 : i32
    return %c0_i32, %c0_i32_0 : i32, i32
  }
  func.func @transform_3(%arg0: i32) -> (i32, i32, i32) {
    %c0_i32 = arith.constant 0 : i32
    %c0_i32_0 = arith.constant 0 : i32
    %c0_i32_1 = arith.constant 0 : i32
    return %arg0, %c0_i32, %c0_i32_0 : i32, i32, i32
  }
}

</mosaic_0001>

<llo_original>
// kernel: tpu_custom_call.1
$region0: #{tpu_custom_call.1}
  #allocation0 [shape = 'u32[]', space=smem, size = 0x4, offset = 0x4, fixed_abs, tag = 'smem constant byte address 0x4 - core index']
  #allocation1 [shape = 'u32[144,128]{1,0:T(1,128)}', space=vmem, size = 0x12000, scoped, tag = 'internal scratch']
  %s0 = inlined_call_operand.vmem [shape: f32[8,16,32], index: 0, kind: input, shape index: {}]
  %s1 = inlined_call_operand.vmem [shape: bf16[160,64], index: 1, kind: input, shape index: {}]
  %s2 = inlined_call_operand.vmem [shape: f32[1,64], index: 2, kind: input, shape index: {}]
  %s3 = inlined_call_operand.hbm [shape: f32[8,16,64], index: 3, kind: output, shape index: {}]
  %s4 = sld [smem:[#allocation0]]
  $region45: #{tpu_custom_call.1} parent=0
    _
  %s6 = ssub.s32 1, %s4
  %s7 = scalar_select 0, %s6, %s4
  $region1: #{tpu_custom_call.1} parent=0
    #allocation2 [shape = 'u8[65536]{0}', space=vmem, size = 0x10000, scoped, tag = 'output window, operand 0']
    #allocation3 [shape = 's32[2]{0}', space=sflag, size = 0x8, scoped, tag = 'scoped memory for tpu_custom_call.1']
    %8 = vsyncpa [#allocation3], 0
    %s9 = scalar_lea.sflag [#allocation3], 1
    %10 = vsyncpa %s9, 0
    loop: start=0, step=1, limit=4
    $region2: #{tpu_custom_call.1} parent=1 // loop_pre_header
      _
    $region3: #{tpu_custom_call.1} parent=1 // loop_header
      %s12 = sphi 0, %s16
      %p13 = scmp.ge.s32.totalorder %s12, 4
      %s22 = sphi 0, %s24
      %s25 = sphi 0, %s22
      %s26 = sphi 0, %s25
      %s42 = sphi 0, %s26
      %s46 = sphi 0, %s46
      %s48 = sphi 0, %s46
      %s49 = sphi 0, %s48
      %s63 = sphi 0, %s49
      %s67 = sphi 0, %s67
      %s69 = sphi 0, %s67
      %s70 = sphi 0, %s69
      %s84 = sphi 0, %s70
      %s90 = sphi 0, %s92
      %s93 = sphi 0, %s90
      %s94 = sphi 0, %s93
      %s110 = sphi 0, %s94
    $region4: #{tpu_custom_call.1} parent=1 // loop_header_branch
      %15 = sbr.rel (%p13) target = $region8
    $region5: #{tpu_custom_call.1} parent=1 // loop_body
      %s17 = ssub.s32 %s12, 1
      %s18 = ssub.s32 %s12, 2
      %s19 = sadd.s32 %s12, 1
      %s20 = ssub.s32 %s12, %s19
      %p21 = scmp.eq.s32.totalorder %s20, 0
      %s23 = sadd.s32 %s22, 1
      %s24 = scalar_select %p21, %s22, %s23
      %p27 = pneg %p21
      %p28 = scmp.eq.s32.totalorder %s12, 1
      %p29 = por %p27, %p28
      %p30 = scmp.ne.s32.totalorder %s22, %s25
      %p31 = scmp.eq.s32.totalorder %s12, 0
      %p32 = por %p30, %p31
      %p33 = scmp.ne.s32.totalorder %s22, %s25
      %p34 = scmp.eq.s32.totalorder %s17, 1
      %p35 = por %p33, %p34
      %p36 = scmp.ne.s32.totalorder %s25, %s26
      %p37 = scmp.eq.s32.totalorder %s17, 0
      %p38 = por %p36, %p37
      %p39 = scmp.ne.s32.totalorder %s25, %s26
      %p40 = scmp.eq.s32.totalorder %s18, 1
      %p41 = por %p39, %p40
      %p43 = scmp.ne.s32.totalorder %s26, %s42
      %p44 = scmp.eq.s32.totalorder %s18, 0
      %p45 = por %p43, %p44
      %s47 = sadd.s32 %s46, 1
      %p50 = scmp.eq.s32.totalorder %s12, 1
      %p51 = scmp.ne.s32.totalorder %s46, %s48
      %p52 = scmp.eq.s32.totalorder %s12, 0
      %p53 = por %p51, %p52
      %p54 = scmp.ne.s32.totalorder %s46, %s48
      %p55 = scmp.eq.s32.totalorder %s17, 1
      %p56 = por %p54, %p55
      %p57 = scmp.ne.s32.totalorder %s48, %s49
      %p58 = scmp.eq.s32.totalorder %s17, 0
      %p59 = por %p57, %p58
      %p60 = scmp.ne.s32.totalorder %s48, %s49
      %p61 = scmp.eq.s32.totalorder %s18, 1
      %p62 = por %p60, %p61
      %p64 = scmp.ne.s32.totalorder %s49, %s63
      %p65 = scmp.eq.s32.totalorder %s18, 0
      %p66 = por %p64, %p65
      %s68 = sadd.s32 %s67, 1
      %p71 = scmp.eq.s32.totalorder %s12, 1
      %p72 = scmp.ne.s32.totalorder %s67, %s69
      %p73 = scmp.eq.s32.totalorder %s12, 0
      %p74 = por %p72, %p73
      %p75 = scmp.ne.s32.totalorder %s67, %s69
      %p76 = scmp.eq.s32.totalorder %s17, 1
      %p77 = por %p75, %p76
      %p78 = scmp.ne.s32.totalorder %s69, %s70
      %p79 = scmp.eq.s32.totalorder %s17, 0
      %p80 = por %p78, %p79
      %p81 = scmp.ne.s32.totalorder %s69, %s70
      %p82 = scmp.eq.s32.totalorder %s18, 1
      %p83 = por %p81, %p82
      %p85 = scmp.ne.s32.totalorder %s70, %s84
      %p86 = scmp.eq.s32.totalorder %s18, 0
      %p87 = por %p85, %p86
      %s88 = ssub.s32 %s12, %s19
      %p89 = scmp.eq.s32.totalorder %s88, 0
      %s91 = sadd.s32 %s90, 1
      %s92 = scalar_select %p89, %s90, %s91
      %p95 = pneg %p89
      %p96 = scmp.eq.s32.totalorder %s12, 1
      %p97 = por %p95, %p96
      %p98 = scmp.ne.s32.totalorder %s90, %s93
      %p99 = scmp.eq.s32.totalorder %s12, 0
      %p100 = por %p98, %p99
      %p101 = scmp.ne.s32.totalorder %s90, %s93
      %p102 = scmp.eq.s32.totalorder %s17, 1
      %p103 = por %p101, %p102
      %p104 = scmp.ne.s32.totalorder %s93, %s94
      %p105 = scmp.eq.s32.totalorder %s17, 0
      %p106 = por %p104, %p105
      %p107 = scmp.ne.s32.totalorder %s93, %s94
      %p108 = scmp.eq.s32.totalorder %s18, 1
      %p109 = por %p107, %p108
      %p111 = scmp.ne.s32.totalorder %s94, %s110
      %p112 = scmp.eq.s32.totalorder %s18, 0
      %p113 = por %p111, %p112
      %p114 = scmp.le.s32.totalorder 1, %s12
      %p115 = scmp.lt.s32.totalorder %s12, 3
      %p116 = pnand %p114, %p115
      %p117 = pneg %p116
      // Predicated region
      $region9: #{tpu_custom_call.1} parent=5 // pred_check
        _
      $region10: #{tpu_custom_call.1} parent=5 // pred_check_branch
        %119 = sbr.rel (%p116) target = $region12
      $region11: #{tpu_custom_call.1} parent=5 // pred_region
        %s120 = ssub.s32 %s12, 1
        // Predicated region
        $region13: #{tpu_custom_call.1} parent=11 // pred_check
          %p121 = pneg %p59
        $region14: #{tpu_custom_call.1} parent=11 // pred_check_branch
          %123 = sbr.rel (%p121) target = $region16
        $region15: #{tpu_custom_call.1} parent=11 // pred_region
          _
        $region16: #{tpu_custom_call.1} parent=11 // pred_fallthru
          _
        // Predicated region
        $region17: #{tpu_custom_call.1} parent=11 // pred_check
          %p124 = pneg %p80
        $region18: #{tpu_custom_call.1} parent=11 // pred_check_branch
          %126 = sbr.rel (%p124) target = $region20
        $region19: #{tpu_custom_call.1} parent=11 // pred_region
          _
        $region20: #{tpu_custom_call.1} parent=11 // pred_fallthru
          _
      $region12: #{tpu_custom_call.1} parent=5 // pred_fallthru
        _
      %p127 = scmp.lt.s32.totalorder %s12, 2
      // Predicated region
      $region21: #{tpu_custom_call.1} parent=5 // pred_check
        %p128 = pneg %p127
      $region22: #{tpu_custom_call.1} parent=5 // pred_check_branch
        %130 = sbr.rel (%p128) target = $region24
      $region23: #{tpu_custom_call.1} parent=5 // pred_region
        // Predicated region
        $region25: #{tpu_custom_call.1} parent=23 // pred_check
          %p131 = pneg %p32
        $region26: #{tpu_custom_call.1} parent=23 // pred_check_branch
          %133 = sbr.rel (%p131) target = $region28
        $region27: #{tpu_custom_call.1} parent=23 // pred_region
          %s134 = smul.u32 4, %s12
          %p135 = scmp.lt.s32.totalorder %s134, 7
          %s136 = scalar_select %p135, %s134, 7
          %s137 = smul.addr %s136, 2
          %s138 = smul.addr %s137, 8
          %s139 = scalar_lea.vmem %s0, %s138
          %s140 = smul.u32 4, %s12
        $region28: #{tpu_custom_call.1} parent=23 // pred_fallthru
          _
      $region24: #{tpu_custom_call.1} parent=5 // pred_fallthru
        _
      %p141 = scmp.le.s32.totalorder 1, %s12
      %p142 = scmp.lt.s32.totalorder %s12, 3
      %p143 = pnand %p141, %p142
      %p144 = pneg %p143
      // Predicated region
      $region29: #{tpu_custom_call.1} parent=5 // pred_check
        _
      $region30: #{tpu_custom_call.1} parent=5 // pred_check_branch
        %146 = sbr.rel (%p143) target = $region32
      $region31: #{tpu_custom_call.1} parent=5 // pred_region
        %s147 = ssub.s32 %s12, 1
        %s148 = smul.u32 4, %s17
        %p149 = scmp.lt.s32.totalorder %s148, 7
        %s150 = scalar_select %p149, %s148, 7
        %s151 = smul.addr %s150, 2
        %s152 = smul.addr %s151, 8
        %s153 = scalar_lea.vmem %s0, %s152
        %p154 = pneg %p38
        %p155 = pneg %p35
        %p156 = pneg %p59
        %p157 = pneg %p56
        %p158 = pneg %p80
        %p159 = pneg %p77
        %p160 = pneg %p106
        %p161 = pneg %p103
        %s162 = sand.u32 %s93, 1
        %s163 = scalar_lea.sflag [#allocation3], %s162
        %s164 = sand.u32 %s93, 1
        %s165 = smul.addr %s164, 64
        %s166 = scalar_lea.vmem [#allocation2], %s165
        %s167 = smul.u32 4, %s17
        %p168 = scmp.lt.s32.totalorder %s167, 7
        %s169 = scalar_select %p168, %s167, 7
        %s170 = smul.addr %s169, 2
        %s171 = smul.addr %s170, 8
        %s172 = scalar_lea.vmem %s0, %s171
        %s173 = smul.u32 4, %s17
        %s174 = smul.u32 4, %s17
        %v176 = vld [vmem:[%s172] sm:$0xff]
        %v177 = vld [vmem:[%s172 + $0x8] sm:$0xff]
        %v178 = vld [vmem:[%s172 + $0x10] sm:$0xff]
        %v179 = vld [vmem:[%s172 + $0x18] sm:$0xff]
        %v180 = vld [vmem:[%s172 + $0x20] sm:$0xff]
        %v181 = vld [vmem:[%s172 + $0x28] sm:$0xff]
        %v182 = vld [vmem:[%s172 + $0x30] sm:$0xff]
        %v183 = vld [vmem:[%s172 + $0x38] sm:$0xff]
        %v184 = vlaneseq
        %v185 = vshrl.u32 %v184, 7
        %v186 = vadd.s32 %v185, 8
        %v187 = vadd.s32 %v185, 16
        %v188 = vadd.s32 %v185, 24
        %v189 = vadd.s32 %v185, 32
        %v190 = vadd.s32 %v185, 40
        %v191 = vadd.s32 %v185, 48
        %v192 = vadd.s32 %v185, 56
        %vm193 = vcmp.lt.s32.totalorder %v185, 0
        %v194 = vsub.s32 0, %v185
        %v195 = vsel %vm193, %v194, %v185
        %v196 = vshrl.u32 %v195, 4
        %v197 = vand.u32 %v195, 15
        %v198 = vsub.s32 0, %v197
        %v199 = vsel %vm193, %v198, %v197
        %vm200 = vcmp.lt.s32.totalorder %v186, 0
        %v201 = vsub.s32 0, %v186
        %v202 = vsel %vm200, %v201, %v186
        %v203 = vshrl.u32 %v202, 4
        %v204 = vand.u32 %v202, 15
        %v205 = vsub.s32 0, %v204
        %v206 = vsel %vm200, %v205, %v204
        %vm207 = vcmp.lt.s32.totalorder %v187, 0
        %v208 = vsub.s32 0, %v187
        %v209 = vsel %vm207, %v208, %v187
        %v210 = vshrl.u32 %v209, 4
        %v211 = vand.u32 %v209, 15
        %v212 = vsub.s32 0, %v211
        %v213 = vsel %vm207, %v212, %v211
        %vm214 = vcmp.lt.s32.totalorder %v188, 0
        %v215 = vsub.s32 0, %v188
        %v216 = vsel %vm214, %v215, %v188
        %v217 = vshrl.u32 %v216, 4
        %v218 = vand.u32 %v216, 15
        %v219 = vsub.s32 0, %v218
        %v220 = vsel %vm214, %v219, %v218
        %vm221 = vcmp.lt.s32.totalorder %v189, 0
        %v222 = vsub.s32 0, %v189
        %v223 = vsel %vm221, %v222, %v189
        %v224 = vshrl.u32 %v223, 4
        %v225 = vand.u32 %v223, 15
        %v226 = vsub.s32 0, %v225
        %v227 = vsel %vm221, %v226, %v225
        %vm228 = vcmp.lt.s32.totalorder %v190, 0
        %v229 = vsub.s32 0, %v190
        %v230 = vsel %vm228, %v229, %v190
        %v231 = vshrl.u32 %v230, 4
        %v232 = vand.u32 %v230, 15
        %v233 = vsub.s32 0, %v232
        %v234 = vsel %vm228, %v233, %v232
        %vm235 = vcmp.lt.s32.totalorder %v191, 0
        %v236 = vsub.s32 0, %v191
        %v237 = vsel %vm235, %v236, %v191
        %v238 = vshrl.u32 %v237, 4
        %v239 = vand.u32 %v237, 15
        %v240 = vsub.s32 0, %v239
        %v241 = vsel %vm235, %v240, %v239
        %vm242 = vcmp.lt.s32.totalorder %v192, 0
        %v243 = vsub.s32 0, %v192
        %v244 = vsel %vm242, %v243, %v192
        %v245 = vshrl.u32 %v244, 4
        %v246 = vand.u32 %v244, 15
        %v247 = vsub.s32 0, %v246
        %v248 = vsel %vm242, %v247, %v246
        %vm249 = vcmp.ne.s32.totalorder %v199, 0
        %vm250 = vcmp.ne.s32.totalorder %v206, 0
        %vm251 = vcmp.ne.s32.totalorder %v213, 0
        %vm252 = vcmp.ne.s32.totalorder %v220, 0
        %vm253 = vcmp.ne.s32.totalorder %v227, 0
        %vm254 = vcmp.ne.s32.totalorder %v234, 0
        %vm255 = vcmp.ne.s32.totalorder %v241, 0
        %vm256 = vcmp.ne.s32.totalorder %v248, 0
        %vm257 = vcmp.lt.s32.totalorder %v199, 0
        %vm258 = vcmp.lt.s32.totalorder %v206, 0
        %vm259 = vcmp.lt.s32.totalorder %v213, 0
        %vm260 = vcmp.lt.s32.totalorder %v220, 0
        %vm261 = vcmp.lt.s32.totalorder %v227, 0
        %vm262 = vcmp.lt.s32.totalorder %v234, 0
        %vm263 = vcmp.lt.s32.totalorder %v241, 0
        %vm264 = vcmp.lt.s32.totalorder %v248, 0
        %vm265 = vmand %vm257, %vm249
        %vm266 = vmand %vm258, %vm250
        %vm267 = vmand %vm259, %vm251
        %vm268 = vmand %vm260, %vm252
        %vm269 = vmand %vm261, %vm253
        %vm270 = vmand %vm262, %vm254
        %vm271 = vmand %vm263, %vm255
        %vm272 = vmand %vm264, %vm256
        %v273 = vadd.s32 %v199, 16
        %v274 = vadd.s32 %v206, 16
        %v275 = vadd.s32 %v213, 16
        %v276 = vadd.s32 %v220, 16
        %v277 = vadd.s32 %v227, 16
        %v278 = vadd.s32 %v234, 16
        %v279 = vadd.s32 %v241, 16
        %v280 = vadd.s32 %v248, 16
        %v281 = vsel %vm265, %v273, %v199
        %v282 = vsel %vm266, %v274, %v206
        %v283 = vsel %vm267, %v275, %v213
        %v284 = vsel %vm268, %v276, %v220
        %v285 = vsel %vm269, %v277, %v227
        %v286 = vsel %vm270, %v278, %v234
        %v287 = vsel %vm271, %v279, %v241
        %v288 = vsel %vm272, %v280, %v248
        %v289 = vrot.slane %v176, 6
        %v290 = vrot.slane %v177, 6
        %v291 = vrot.slane %v178, 6
        %v292 = vrot.slane %v179, 6
        %v293 = vrot.slane %v180, 6
        %v294 = vrot.slane %v181, 6
        %v295 = vrot.slane %v182, 6
        %v296 = vrot.slane %v183, 6
        %vm297 = vcmp.lt.s32.totalorder %v185, 2
        %v298 = vsel %vm297, %v295, %v296
        %v299 = vsel %vm297, %v294, %v295
        %v300 = vsel %vm297, %v293, %v294
        %v301 = vsel %vm297, %v292, %v293
        %v302 = vsel %vm297, %v291, %v292
        %v303 = vsel %vm297, %v290, %v291
        %v304 = vsel %vm297, %v289, %v290
        %v305 = vsel %vm297, %v296, %v289
        %v306 = vadd.s32 %v281, 4294967294
        %v307 = vadd.s32 %v282, 4294967294
        %v308 = vadd.s32 %v283, 4294967294
        %v309 = vadd.s32 %v284, 4294967294
        %v310 = vadd.s32 %v285, 4294967294
        %v311 = vadd.s32 %v286, 4294967294
        %v312 = vadd.s32 %v287, 4294967294
        %v313 = vadd.s32 %v288, 4294967294
        %vm314 = vcmp.ge.s32.totalorder %v306, 0
        %vm315 = vcmp.ge.s32.totalorder %v307, 0
        %vm316 = vcmp.ge.s32.totalorder %v308, 0
        %vm317 = vcmp.ge.s32.totalorder %v309, 0
        %vm318 = vcmp.ge.s32.totalorder %v310, 0
        %vm319 = vcmp.ge.s32.totalorder %v311, 0
        %vm320 = vcmp.ge.s32.totalorder %v312, 0
        %vm321 = vcmp.ge.s32.totalorder %v313, 0
        %vm322 = vcmp.lt.s32.totalorder %v306, 16
        %vm323 = vcmp.lt.s32.totalorder %v307, 16
        %vm324 = vcmp.lt.s32.totalorder %v308, 16
        %vm325 = vcmp.lt.s32.totalorder %v309, 16
        %vm326 = vcmp.lt.s32.totalorder %v310, 16
        %vm327 = vcmp.lt.s32.totalorder %v311, 16
        %vm328 = vcmp.lt.s32.totalorder %v312, 16
        %vm329 = vcmp.lt.s32.totalorder %v313, 16
        %vm330 = vmand %vm314, %vm322
        %vm331 = vmand %vm315, %vm323
        %vm332 = vmand %vm316, %vm324
        %vm333 = vmand %vm317, %vm325
        %vm334 = vmand %vm318, %vm326
        %vm335 = vmand %vm319, %vm327
        %vm336 = vmand %vm320, %vm328
        %vm337 = vmand %vm321, %vm329
        %v338 = vsel %vm330, 1, 0
        %v339 = vsel %vm331, 1, 0
        %v340 = vsel %vm332, 1, 0
        %v341 = vsel %vm333, 1, 0
        %v342 = vsel %vm334, 1, 0
        %v343 = vsel %vm335, 1, 0
        %v344 = vsel %vm336, 1, 0
        %v345 = vsel %vm337, 1, 0
        %vm346 = vcmp.eq.s32.totalorder %v338, 1
        %vm347 = vcmp.eq.s32.totalorder %v339, 1
        %vm348 = vcmp.eq.s32.totalorder %v340, 1
        %vm349 = vcmp.eq.s32.totalorder %v341, 1
        %vm350 = vcmp.eq.s32.totalorder %v342, 1
        %vm351 = vcmp.eq.s32.totalorder %v343, 1
        %vm352 = vcmp.eq.s32.totalorder %v344, 1
        %vm353 = vcmp.eq.s32.totalorder %v345, 1
        %v354 = vsel %vm346, %v305, 0.0
        %v355 = vsel %vm347, %v304, 0.0
        %v356 = vsel %vm348, %v303, 0.0
        %v357 = vsel %vm349, %v302, 0.0
        %v358 = vsel %vm350, %v301, 0.0
        %v359 = vsel %vm351, %v300, 0.0
        %v360 = vsel %vm352, %v299, 0.0
        %v361 = vsel %vm353, %v298, 0.0
        %v362 = vrot.slane %v176, 7
        %v363 = vrot.slane %v177, 7
        %v364 = vrot.slane %v178, 7
        %v365 = vrot.slane %v179, 7
        %v366 = vrot.slane %v180, 7
        %v367 = vrot.slane %v181, 7
        %v368 = vrot.slane %v182, 7
        %v369 = vrot.slane %v183, 7
        %vm370 = vcmp.lt.s32.totalorder %v185, 1
        %v371 = vsel %vm370, %v368, %v369
        %v372 = vsel %vm370, %v367, %v368
        %v373 = vsel %vm370, %v366, %v367
        %v374 = vsel %vm370, %v365, %v366
        %v375 = vsel %vm370, %v364, %v365
        %v376 = vsel %vm370, %v363, %v364
        %v377 = vsel %vm370, %v362, %v363
        %v378 = vsel %vm370, %v369, %v362
        %v379 = vadd.s32 %v281, 4294967295
        %v380 = vadd.s32 %v282, 4294967295
        %v381 = vadd.s32 %v283, 4294967295
        %v382 = vadd.s32 %v284, 4294967295
        %v383 = vadd.s32 %v285, 4294967295
        %v384 = vadd.s32 %v286, 4294967295
        %v385 = vadd.s32 %v287, 4294967295
        %v386 = vadd.s32 %v288, 4294967295
        %vm387 = vcmp.ge.s32.totalorder %v379, 0
        %vm388 = vcmp.ge.s32.totalorder %v380, 0
        %vm389 = vcmp.ge.s32.totalorder %v381, 0
        %vm390 = vcmp.ge.s32.totalorder %v382, 0
        %vm391 = vcmp.ge.s32.totalorder %v383, 0
        %vm392 = vcmp.ge.s32.totalorder %v384, 0
        %vm393 = vcmp.ge.s32.totalorder %v385, 0
        %vm394 = vcmp.ge.s32.totalorder %v386, 0
        %vm395 = vcmp.lt.s32.totalorder %v379, 16
        %vm396 = vcmp.lt.s32.totalorder %v380, 16
        %vm397 = vcmp.lt.s32.totalorder %v381, 16
        %vm398 = vcmp.lt.s32.totalorder %v382, 16
        %vm399 = vcmp.lt.s32.totalorder %v383, 16
        %vm400 = vcmp.lt.s32.totalorder %v384, 16
        %vm401 = vcmp.lt.s32.totalorder %v385, 16
        %vm402 = vcmp.lt.s32.totalorder %v386, 16
        %vm403 = vmand %vm387, %vm395
        %vm404 = vmand %vm388, %vm396
        %vm405 = vmand %vm389, %vm397
        %vm406 = vmand %vm390, %vm398
        %vm407 = vmand %vm391, %vm399
        %vm408 = vmand %vm392, %vm400
        %vm409 = vmand %vm393, %vm401
        %vm410 = vmand %vm394, %vm402
        %v411 = vsel %vm403, 1, 0
        %v412 = vsel %vm404, 1, 0
        %v413 = vsel %vm405, 1, 0
        %v414 = vsel %vm406, 1, 0
        %v415 = vsel %vm407, 1, 0
        %v416 = vsel %vm408, 1, 0
        %v417 = vsel %vm409, 1, 0
        %v418 = vsel %vm410, 1, 0
        %vm419 = vcmp.eq.s32.totalorder %v411, 1
        %vm420 = vcmp.eq.s32.totalorder %v412, 1
        %vm421 = vcmp.eq.s32.totalorder %v413, 1
        %vm422 = vcmp.eq.s32.totalorder %v414, 1
        %vm423 = vcmp.eq.s32.totalorder %v415, 1
        %vm424 = vcmp.eq.s32.totalorder %v416, 1
        %vm425 = vcmp.eq.s32.totalorder %v417, 1
        %vm426 = vcmp.eq.s32.totalorder %v418, 1
        %v427 = vsel %vm419, %v378, 0.0
        %v428 = vsel %vm420, %v377, 0.0
        %v429 = vsel %vm421, %v376, 0.0
        %v430 = vsel %vm422, %v375, 0.0
        %v431 = vsel %vm423, %v374, 0.0
        %v432 = vsel %vm424, %v373, 0.0
        %v433 = vsel %vm425, %v372, 0.0
        %v434 = vsel %vm426, %v371, 0.0
        %vm435 = vcmp.ge.s32.totalorder %v281, 0
        %vm436 = vcmp.ge.s32.totalorder %v282, 0
        %vm437 = vcmp.ge.s32.totalorder %v283, 0
        %vm438 = vcmp.ge.s32.totalorder %v284, 0
        %vm439 = vcmp.ge.s32.totalorder %v285, 0
        %vm440 = vcmp.ge.s32.totalorder %v286, 0
        %vm441 = vcmp.ge.s32.totalorder %v287, 0
        %vm442 = vcmp.ge.s32.totalorder %v288, 0
        %vm443 = vcmp.lt.s32.totalorder %v281, 16
        %vm444 = vcmp.lt.s32.totalorder %v282, 16
        %vm445 = vcmp.lt.s32.totalorder %v283, 16
        %vm446 = vcmp.lt.s32.totalorder %v284, 16
        %vm447 = vcmp.lt.s32.totalorder %v285, 16
        %vm448 = vcmp.lt.s32.totalorder %v286, 16
        %vm449 = vcmp.lt.s32.totalorder %v287, 16
        %vm450 = vcmp.lt.s32.totalorder %v288, 16
        %vm451 = vmand %vm435, %vm443
        %vm452 = vmand %vm436, %vm444
        %vm453 = vmand %vm437, %vm445
        %vm454 = vmand %vm438, %vm446
        %vm455 = vmand %vm439, %vm447
        %vm456 = vmand %vm440, %vm448
        %vm457 = vmand %vm441, %vm449
        %vm458 = vmand %vm442, %vm450
        %v459 = vsel %vm451, 1, 0
        %v460 = vsel %vm452, 1, 0
        %v461 = vsel %vm453, 1, 0
        %v462 = vsel %vm454, 1, 0
        %v463 = vsel %vm455, 1, 0
        %v464 = vsel %vm456, 1, 0
        %v465 = vsel %vm457, 1, 0
        %v466 = vsel %vm458, 1, 0
        %vm467 = vcmp.eq.s32.totalorder %v459, 1
        %vm468 = vcmp.eq.s32.totalorder %v460, 1
        %vm469 = vcmp.eq.s32.totalorder %v461, 1
        %vm470 = vcmp.eq.s32.totalorder %v462, 1
        %vm471 = vcmp.eq.s32.totalorder %v463, 1
        %vm472 = vcmp.eq.s32.totalorder %v464, 1
        %vm473 = vcmp.eq.s32.totalorder %v465, 1
        %vm474 = vcmp.eq.s32.totalorder %v466, 1
        %v475 = vsel %vm467, %v176, 0.0
        %v476 = vsel %vm468, %v177, 0.0
        %v477 = vsel %vm469, %v178, 0.0
        %v478 = vsel %vm470, %v179, 0.0
        %v479 = vsel %vm471, %v180, 0.0
        %v480 = vsel %vm472, %v181, 0.0
        %v481 = vsel %vm473, %v182, 0.0
        %v482 = vsel %vm474, %v183, 0.0
        %v483 = vrot.slane %v176, 1
        %v484 = vrot.slane %v177, 1
        %v485 = vrot.slane %v178, 1
        %v486 = vrot.slane %v179, 1
        %v487 = vrot.slane %v180, 1
        %v488 = vrot.slane %v181, 1
        %v489 = vrot.slane %v182, 1
        %v490 = vrot.slane %v183, 1
        %vm491 = vcmp.lt.s32.totalorder %v185, 7
        %v492 = vsel %vm491, %v489, %v490
        %v493 = vsel %vm491, %v488, %v489
        %v494 = vsel %vm491, %v487, %v488
        %v495 = vsel %vm491, %v486, %v487
        %v496 = vsel %vm491, %v485, %v486
        %v497 = vsel %vm491, %v484, %v485
        %v498 = vsel %vm491, %v483, %v484
        %v499 = vsel %vm491, %v490, %v483
        %v500 = vadd.s32 %v281, 1
        %v501 = vadd.s32 %v282, 1
        %v502 = vadd.s32 %v283, 1
        %v503 = vadd.s32 %v284, 1
        %v504 = vadd.s32 %v285, 1
        %v505 = vadd.s32 %v286, 1
        %v506 = vadd.s32 %v287, 1
        %v507 = vadd.s32 %v288, 1
        %vm508 = vcmp.ge.s32.totalorder %v500, 0
        %vm509 = vcmp.ge.s32.totalorder %v501, 0
        %vm510 = vcmp.ge.s32.totalorder %v502, 0
        %vm511 = vcmp.ge.s32.totalorder %v503, 0
        %vm512 = vcmp.ge.s32.totalorder %v504, 0
        %vm513 = vcmp.ge.s32.totalorder %v505, 0
        %vm514 = vcmp.ge.s32.totalorder %v506, 0
        %vm515 = vcmp.ge.s32.totalorder %v507, 0
        %vm516 = vcmp.lt.s32.totalorder %v500, 16
        %vm517 = vcmp.lt.s32.totalorder %v501, 16
        %vm518 = vcmp.lt.s32.totalorder %v502, 16
        %vm519 = vcmp.lt.s32.totalorder %v503, 16
        %vm520 = vcmp.lt.s32.totalorder %v504, 16
        %vm521 = vcmp.lt.s32.totalorder %v505, 16
        %vm522 = vcmp.lt.s32.totalorder %v506, 16
        %vm523 = vcmp.lt.s32.totalorder %v507, 16
        %vm524 = vmand %vm508, %vm516
        %vm525 = vmand %vm509, %vm517
        %vm526 = vmand %vm510, %vm518
        %vm527 = vmand %vm511, %vm519
        %vm528 = vmand %vm512, %vm520
        %vm529 = vmand %vm513, %vm521
        %vm530 = vmand %vm514, %vm522
        %vm531 = vmand %vm515, %vm523
        %v532 = vsel %vm524, 1, 0
        %v533 = vsel %vm525, 1, 0
        %v534 = vsel %vm526, 1, 0
        %v535 = vsel %vm527, 1, 0
        %v536 = vsel %vm528, 1, 0
        %v537 = vsel %vm529, 1, 0
        %v538 = vsel %vm530, 1, 0
        %v539 = vsel %vm531, 1, 0
        %vm540 = vcmp.eq.s32.totalorder %v532, 1
        %vm541 = vcmp.eq.s32.totalorder %v533, 1
        %vm542 = vcmp.eq.s32.totalorder %v534, 1
        %vm543 = vcmp.eq.s32.totalorder %v535, 1
        %vm544 = vcmp.eq.s32.totalorder %v536, 1
        %vm545 = vcmp.eq.s32.totalorder %v537, 1
        %vm546 = vcmp.eq.s32.totalorder %v538, 1
        %vm547 = vcmp.eq.s32.totalorder %v539, 1
        %v548 = vsel %vm540, %v498, 0.0
        %v549 = vsel %vm541, %v497, 0.0
        %v550 = vsel %vm542, %v496, 0.0
        %v551 = vsel %vm543, %v495, 0.0
        %v552 = vsel %vm544, %v494, 0.0
        %v553 = vsel %vm545, %v493, 0.0
        %v554 = vsel %vm546, %v492, 0.0
        %v555 = vsel %vm547, %v499, 0.0
        %v556 = vrot.slane %v176, 2
        %v557 = vrot.slane %v177, 2
        %v558 = vrot.slane %v178, 2
        %v559 = vrot.slane %v179, 2
        %v560 = vrot.slane %v180, 2
        %v561 = vrot.slane %v181, 2
        %v562 = vrot.slane %v182, 2
        %v563 = vrot.slane %v183, 2
        %vm564 = vcmp.lt.s32.totalorder %v185, 6
        %v565 = vsel %vm564, %v562, %v563
        %v566 = vsel %vm564, %v561, %v562
        %v567 = vsel %vm564, %v560, %v561
        %v568 = vsel %vm564, %v559, %v560
        %v569 = vsel %vm564, %v558, %v559
        %v570 = vsel %vm564, %v557, %v558
        %v571 = vsel %vm564, %v556, %v557
        %v572 = vsel %vm564, %v563, %v556
        %v573 = vadd.s32 %v281, 2
        %v574 = vadd.s32 %v282, 2
        %v575 = vadd.s32 %v283, 2
        %v576 = vadd.s32 %v284, 2
        %v577 = vadd.s32 %v285, 2
        %v578 = vadd.s32 %v286, 2
        %v579 = vadd.s32 %v287, 2
        %v580 = vadd.s32 %v288, 2
        %vm581 = vcmp.ge.s32.totalorder %v573, 0
        %vm582 = vcmp.ge.s32.totalorder %v574, 0
        %vm583 = vcmp.ge.s32.totalorder %v575, 0
        %vm584 = vcmp.ge.s32.totalorder %v576, 0
        %vm585 = vcmp.ge.s32.totalorder %v577, 0
        %vm586 = vcmp.ge.s32.totalorder %v578, 0
        %vm587 = vcmp.ge.s32.totalorder %v579, 0
        %vm588 = vcmp.ge.s32.totalorder %v580, 0
        %vm589 = vcmp.lt.s32.totalorder %v573, 16
        %vm590 = vcmp.lt.s32.totalorder %v574, 16
        %vm591 = vcmp.lt.s32.totalorder %v575, 16
        %vm592 = vcmp.lt.s32.totalorder %v576, 16
        %vm593 = vcmp.lt.s32.totalorder %v577, 16
        %vm594 = vcmp.lt.s32.totalorder %v578, 16
        %vm595 = vcmp.lt.s32.totalorder %v579, 16
        %vm596 = vcmp.lt.s32.totalorder %v580, 16
        %vm597 = vmand %vm581, %vm589
        %vm598 = vmand %vm582, %vm590
        %vm599 = vmand %vm583, %vm591
        %vm600 = vmand %vm584, %vm592
        %vm601 = vmand %vm585, %vm593
        %vm602 = vmand %vm586, %vm594
        %vm603 = vmand %vm587, %vm595
        %vm604 = vmand %vm588, %vm596
        %v605 = vsel %vm597, 1, 0
        %v606 = vsel %vm598, 1, 0
        %v607 = vsel %vm599, 1, 0
        %v608 = vsel %vm600, 1, 0
        %v609 = vsel %vm601, 1, 0
        %v610 = vsel %vm602, 1, 0
        %v611 = vsel %vm603, 1, 0
        %v612 = vsel %vm604, 1, 0
        %vm613 = vcmp.eq.s32.totalorder %v605, 1
        %vm614 = vcmp.eq.s32.totalorder %v606, 1
        %vm615 = vcmp.eq.s32.totalorder %v607, 1
        %vm616 = vcmp.eq.s32.totalorder %v608, 1
        %vm617 = vcmp.eq.s32.totalorder %v609, 1
        %vm618 = vcmp.eq.s32.totalorder %v610, 1
        %vm619 = vcmp.eq.s32.totalorder %v611, 1
        %vm620 = vcmp.eq.s32.totalorder %v612, 1
        %v621 = vsel %vm613, %v571, 0.0
        %v622 = vsel %vm614, %v570, 0.0
        %v623 = vsel %vm615, %v569, 0.0
        %v624 = vsel %vm616, %v568, 0.0
        %v625 = vsel %vm617, %v567, 0.0
        %v626 = vsel %vm618, %v566, 0.0
        %v627 = vsel %vm619, %v565, 0.0
        %v628 = vsel %vm620, %v572, 0.0
        %637 = vrot.lane.b32.xlu0 %v427, 32
        %v638 = vpop.permute.xlu0 %637
        %639 = vrot.lane.b32.xlu0 %v428, 32
        %v640 = vpop.permute.xlu0 %639
        %641 = vrot.lane.b32.xlu0 %v429, 32
        %v642 = vpop.permute.xlu0 %641
        %643 = vrot.lane.b32.xlu0 %v430, 32
        %v644 = vpop.permute.xlu0 %643
        %645 = vrot.lane.b32.xlu0 %v431, 32
        %v646 = vpop.permute.xlu0 %645
        %647 = vrot.lane.b32.xlu0 %v432, 32
        %v648 = vpop.permute.xlu0 %647
        %649 = vrot.lane.b32.xlu0 %v433, 32
        %v650 = vpop.permute.xlu0 %649
        %651 = vrot.lane.b32.xlu0 %v434, 32
        %v652 = vpop.permute.xlu0 %651
        %669 = vrot.lane.b32.xlu0 %v475, 64
        %v670 = vpop.permute.xlu0 %669
        %671 = vrot.lane.b32.xlu0 %v476, 64
        %v672 = vpop.permute.xlu0 %671
        %673 = vrot.lane.b32.xlu0 %v477, 64
        %v674 = vpop.permute.xlu0 %673
        %675 = vrot.lane.b32.xlu0 %v478, 64
        %v676 = vpop.permute.xlu0 %675
        %677 = vrot.lane.b32.xlu0 %v479, 64
        %v678 = vpop.permute.xlu0 %677
        %679 = vrot.lane.b32.xlu0 %v480, 64
        %v680 = vpop.permute.xlu0 %679
        %681 = vrot.lane.b32.xlu0 %v481, 64
        %v682 = vpop.permute.xlu0 %681
        %683 = vrot.lane.b32.xlu0 %v482, 64
        %v684 = vpop.permute.xlu0 %683
        %701 = vrot.lane.b32.xlu0 %v548, 96
        %v702 = vpop.permute.xlu0 %701
        %703 = vrot.lane.b32.xlu0 %v549, 96
        %v704 = vpop.permute.xlu0 %703
        %705 = vrot.lane.b32.xlu0 %v550, 96
        %v706 = vpop.permute.xlu0 %705
        %707 = vrot.lane.b32.xlu0 %v551, 96
        %v708 = vpop.permute.xlu0 %707
        %709 = vrot.lane.b32.xlu0 %v552, 96
        %v710 = vpop.permute.xlu0 %709
        %711 = vrot.lane.b32.xlu0 %v553, 96
        %v712 = vpop.permute.xlu0 %711
        %713 = vrot.lane.b32.xlu0 %v554, 96
        %v714 = vpop.permute.xlu0 %713
        %715 = vrot.lane.b32.xlu0 %v555, 96
        %v716 = vpop.permute.xlu0 %715
        %vm725 = vcmask 261120
        %v726 = vsel %vm725, %v354, %v638
        %v727 = vsel %vm725, %v355, %v640
        %v728 = vsel %vm725, %v356, %v642
        %v729 = vsel %vm725, %v357, %v644
        %v730 = vsel %vm725, %v358, %v646
        %v731 = vsel %vm725, %v359, %v648
        %v732 = vsel %vm725, %v360, %v650
        %v733 = vsel %vm725, %v361, %v652
        %vm734 = vcmask 523264
        %v735 = vsel %vm734, %v726, %v670
        %v736 = vsel %vm734, %v727, %v672
        %v737 = vsel %vm734, %v728, %v674
        %v738 = vsel %vm734, %v729, %v676
        %v739 = vsel %vm734, %v730, %v678
        %v740 = vsel %vm734, %v731, %v680
        %v741 = vsel %vm734, %v732, %v682
        %v742 = vsel %vm734, %v733, %v684
        %vm743 = vcmask 785408
        %v744 = vsel %vm743, %v735, %v702
        %v745 = vsel %vm743, %v736, %v704
        %v746 = vsel %vm743, %v737, %v706
        %v747 = vsel %vm743, %v738, %v708
        %v748 = vsel %vm743, %v739, %v710
        %v749 = vsel %vm743, %v740, %v712
        %v750 = vsel %vm743, %v741, %v714
        %v751 = vsel %vm743, %v742, %v716
        %v752 = vpack.c.bf16 %v745, %v744
        %v753 = vpack.c.bf16 %v622, %v621
        %v754 = vpack.c.bf16 %v747, %v746
        %v755 = vpack.c.bf16 %v624, %v623
        %v756 = vpack.c.bf16 %v749, %v748
        %v757 = vpack.c.bf16 %v626, %v625
        %v758 = vpack.c.bf16 %v751, %v750
        %v759 = vpack.c.bf16 %v628, %v627
        %v760 = vld [vmem:[%s1] sm:$0xf]
        %v761 = vld [vmem:[%s1 + $0x4] sm:$0xf]
        %v762 = vld [vmem:[%s1 + $0x8] sm:$0xf]
        %v763 = vld [vmem:[%s1 + $0xc] sm:$0xf]
        %v764 = vld [vmem:[%s1 + $0x10] sm:$0xf]
        %v765 = vld [vmem:[%s1 + $0x14] sm:$0xf]
        %v766 = vld [vmem:[%s1 + $0x18] sm:$0xf]
        %v767 = vld [vmem:[%s1 + $0x1c] sm:$0xf]
        %v768 = vld [vmem:[%s1 + $0x20] sm:$0xf]
        %v769 = vld [vmem:[%s1 + $0x24] sm:$0xf]
        %v770 = vld [vmem:[%s1 + $0x28] sm:$0xf]
        %v771 = vld [vmem:[%s1 + $0x2c] sm:$0xf]
        %v772 = vld [vmem:[%s1 + $0x30] sm:$0xf]
        %v773 = vld [vmem:[%s1 + $0x34] sm:$0xf]
        %v774 = vld [vmem:[%s1 + $0x38] sm:$0xf]
        %v775 = vld [vmem:[%s1 + $0x3c] sm:$0xf]
        %v776 = vld [vmem:[%s1 + $0x40] sm:$0xf]
        %v777 = vld [vmem:[%s1 + $0x44] sm:$0xf]
        %v778 = vld [vmem:[%s1 + $0x48] sm:$0xf]
        %v779 = vld [vmem:[%s1 + $0x4c] sm:$0xf]
        %v780 = vld [vmem:[%s2] sm:$0x1]
        %v782 = vlaneseq
        %v783 = vshrl.u32 %v782, 7
        %v784 = vsub.s32 0, %v783
        %v785 = vrot.slane %v780, %v784
        %v807 = vunpack.c.l.b16 %v760
        %v808 = vunpack.c.l.b16 %v761
        %v809 = vunpack.c.l.b16 %v762
        %v810 = vunpack.c.l.b16 %v763
        %v811 = vunpack.c.l.b16 %v764
        %v812 = vunpack.c.l.b16 %v765
        %v813 = vunpack.c.l.b16 %v766
        %v814 = vunpack.c.l.b16 %v767
        %v815 = vunpack.c.l.b16 %v768
        %v816 = vunpack.c.l.b16 %v769
        %v817 = vunpack.c.l.b16 %v770
        %v818 = vunpack.c.l.b16 %v771
        %v819 = vunpack.c.l.b16 %v772
        %v820 = vunpack.c.l.b16 %v773
        %v821 = vunpack.c.l.b16 %v774
        %v822 = vunpack.c.l.b16 %v775
        %v823 = vunpack.c.l.b16 %v776
        %v824 = vunpack.c.l.b16 %v777
        %v825 = vunpack.c.l.b16 %v778
        %v826 = vunpack.c.l.b16 %v779
        %v827 = vpack.c.b16 %v808, %v807
        %v828 = vpack.c.b16 %v810, %v809
        %v829 = vpack.c.b16 %v812, %v811
        %v830 = vpack.c.b16 %v814, %v813
        %v831 = vpack.c.b16 %v816, %v815
        %v832 = vpack.c.b16 %v818, %v817
        %v833 = vpack.c.b16 %v820, %v819
        %v834 = vpack.c.b16 %v822, %v821
        %v835 = vpack.c.b16 %v824, %v823
        %v836 = vpack.c.b16 %v826, %v825
        %v848 = vsel %vm725, %v753, 0
        %v851 = vsel %vm725, %v755, 0
        %v854 = vsel %vm725, %v757, 0
        %v857 = vsel %vm725, %v759, 0
        %859 = vmatprep.subr.bf16.mxu0 0
        %860 = vmatpush1.bf16.msra.mxu0 %v834
        %861 = vmatprep.subr.bf16.mxu0 0
        %862 = vmatpush1.bf16.msra.mxu0 %v833
        %863 = vmatprep.subr.bf16.mxu0 0
        %864 = vmatpush1.bf16.msra.mxu0 %v832
        %865 = vmatprep.subr.bf16.mxu0 0
        %866 = vmatpush1.bf16.msra.mxu0 %v831
        %867 = vmatprep.subr.bf16.mxu0 0
        %868 = vmatpush1.bf16.msra.mxu0 %v830
        %869 = vmatprep.subr.bf16.mxu0 0
        %870 = vmatpush1.bf16.msra.mxu0 %v829
        %871 = vmatprep.subr.bf16.mxu0 0
        %872 = vmatpush1.bf16.msra.mxu0 %v828
        %873 = vmatprep.subr.bf16.mxu0 0
        %874 = vmatpush1.bf16.msra.mxu0 %v827
        %875 = vmatprep.subr.bf16.mxu0 0
        %876 = vmatpush2.bf16.msra.mxu0 0
        %877 = vmatprep.subr.bf16.mxu0 0
        %878 = vmatpush2.bf16.msra.mxu0 0
        %879 = vmatprep.subr.bf16.mxu0 0
        %880 = vmatpush2.bf16.msra.mxu0 0
        %881 = vmatprep.subr.bf16.mxu0 0
        %882 = vmatpush2.bf16.msra.mxu0 0
        %883 = vmatprep.subr.bf16.mxu0 0
        %884 = vmatpush2.bf16.msra.mxu0 0
        %885 = vmatprep.subr.bf16.mxu0 0
        %886 = vmatpush2.bf16.msra.mxu0 0
        %887 = vmatprep.subr.bf16.mxu0 0
        %888 = vmatpush2.bf16.msra.mxu0 %v836
        %889 = vmatprep.subr.bf16.mxu0 0
        %890 = vmatpush2.bf16.msra.mxu0 %v835
        %891 = vmatprep.mubr.bf16.mxu0 %v848
        %892 = vmatmul.mubr.bf16.gmra.mxu0 %v752
        %v893 = vpop.f32.mrf.mxu0
        %v894 = vadd.f32 %v785, %v893
        %v895 = vpop.f32.mrf.mxu0
        %v896 = vpop.f32.mrf.mxu0
        %v897 = vadd.f32 %v785, %v896
        %v898 = vpop.f32.mrf.mxu0
        %899 = vmatprep.mubr.bf16.mxu0 %v851
        %900 = vmatmul.mubr.bf16.gmra.mxu0 %v754
        %v901 = vpop.f32.mrf.mxu0
        %v902 = vadd.f32 %v785, %v901
        %v903 = vpop.f32.mrf.mxu0
        %v904 = vpop.f32.mrf.mxu0
        %v905 = vadd.f32 %v785, %v904
        %v906 = vpop.f32.mrf.mxu0
        %907 = vmatprep.mubr.bf16.mxu0 %v854
        %908 = vmatmul.mubr.bf16.gmra.mxu0 %v756
        %v909 = vpop.f32.mrf.mxu0
        %v910 = vadd.f32 %v785, %v909
        %v911 = vpop.f32.mrf.mxu0
        %v912 = vpop.f32.mrf.mxu0
        %v913 = vadd.f32 %v785, %v912
        %v914 = vpop.f32.mrf.mxu0
        %915 = vmatprep.mubr.bf16.mxu0 %v857
        %916 = vmatmul.mubr.bf16.gmra.mxu0 %v758
        %v917 = vpop.f32.mrf.mxu0
        %v918 = vadd.f32 %v785, %v917
        %v919 = vpop.f32.mrf.mxu0
        %v920 = vpop.f32.mrf.mxu0
        %v921 = vadd.f32 %v785, %v920
        %v922 = vpop.f32.mrf.mxu0
        %923 = vdwg.mxu0
        %v924 = vand.u32 2147483647, %v894
        %v925 = vand.u32 2147483647, %v897
        %v926 = vand.u32 2147483647, %v902
        %v927 = vand.u32 2147483647, %v905
        %v928 = vand.u32 2147483647, %v910
        %v929 = vand.u32 2147483647, %v913
        %v930 = vand.u32 2147483647, %v918
        %v931 = vand.u32 2147483647, %v921
        %v932 = vsub.f32 0.0, %v924
        %v933 = vsub.f32 0.0, %v925
        %v934 = vsub.f32 0.0, %v926
        %v935 = vsub.f32 0.0, %v927
        %v936 = vsub.f32 0.0, %v928
        %v937 = vsub.f32 0.0, %v929
        %v938 = vsub.f32 0.0, %v930
        %v939 = vsub.f32 0.0, %v931
        %v940 = vmul.f32 %v932, 1.442695
        %v941 = vpow.pop %v940
        %v942 = vmul.f32 %v933, 1.442695
        %v943 = vpow.pop %v942
        %v944 = vmul.f32 %v934, 1.442695
        %v945 = vpow.pop %v944
        %v946 = vmul.f32 %v935, 1.442695
        %v947 = vpow.pop %v946
        %v948 = vmul.f32 %v936, 1.442695
        %v949 = vpow.pop %v948
        %v950 = vmul.f32 %v937, 1.442695
        %v951 = vpow.pop %v950
        %v952 = vmul.f32 %v938, 1.442695
        %v953 = vpow.pop %v952
        %v954 = vmul.f32 %v939, 1.442695
        %v955 = vpow.pop %v954
        %v956 = vadd.f32 %v941, 1.0
        %v957 = vlog2.pop %v956
        %v958 = vmul.f32 %v957, 0.6931472
        %v959 = vmul.f32 -0.5, %v941
        %v960 = vadd.f32 %v959, 1.0
        %v961 = vmul.f32 %v960, %v941
        %v962 = vand.u32 2147483647, %v941
        %vm963 = vcmp.lt.f32.partialorder %v962, 0.0004427343
        %v964 = vsel %vm963, %v961, %v958
        %v965 = vadd.f32 %v943, 1.0
        %v966 = vlog2.pop %v965
        %v967 = vmul.f32 %v966, 0.6931472
        %v968 = vmul.f32 -0.5, %v943
        %v969 = vadd.f32 %v968, 1.0
        %v970 = vmul.f32 %v969, %v943
        %v971 = vand.u32 2147483647, %v943
        %vm972 = vcmp.lt.f32.partialorder %v971, 0.0004427343
        %v973 = vsel %vm972, %v970, %v967
        %v974 = vadd.f32 %v945, 1.0
        %v975 = vlog2.pop %v974
        %v976 = vmul.f32 %v975, 0.6931472
        %v977 = vmul.f32 -0.5, %v945
        %v978 = vadd.f32 %v977, 1.0
        %v979 = vmul.f32 %v978, %v945
        %v980 = vand.u32 2147483647, %v945
        %vm981 = vcmp.lt.f32.partialorder %v980, 0.0004427343
        %v982 = vsel %vm981, %v979, %v976
        %v983 = vadd.f32 %v947, 1.0
        %v984 = vlog2.pop %v983
        %v985 = vmul.f32 %v984, 0.6931472
        %v986 = vmul.f32 -0.5, %v947
        %v987 = vadd.f32 %v986, 1.0
        %v988 = vmul.f32 %v987, %v947
        %v989 = vand.u32 2147483647, %v947
        %vm990 = vcmp.lt.f32.partialorder %v989, 0.0004427343
        %v991 = vsel %vm990, %v988, %v985
        %v992 = vadd.f32 %v949, 1.0
        %v993 = vlog2.pop %v992
        %v994 = vmul.f32 %v993, 0.6931472
        %v995 = vmul.f32 -0.5, %v949
        %v996 = vadd.f32 %v995, 1.0
        %v997 = vmul.f32 %v996, %v949
        %v998 = vand.u32 2147483647, %v949
        %vm999 = vcmp.lt.f32.partialorder %v998, 0.0004427343
        %v1000 = vsel %vm999, %v997, %v994
        %v1001 = vadd.f32 %v951, 1.0
        %v1002 = vlog2.pop %v1001
        %v1003 = vmul.f32 %v1002, 0.6931472
        %v1004 = vmul.f32 -0.5, %v951
        %v1005 = vadd.f32 %v1004, 1.0
        %v1006 = vmul.f32 %v1005, %v951
        %v1007 = vand.u32 2147483647, %v951
        %vm1008 = vcmp.lt.f32.partialorder %v1007, 0.0004427343
        %v1009 = vsel %vm1008, %v1006, %v1003
        %v1010 = vadd.f32 %v953, 1.0
        %v1011 = vlog2.pop %v1010
        %v1012 = vmul.f32 %v1011, 0.6931472
        %v1013 = vmul.f32 -0.5, %v953
        %v1014 = vadd.f32 %v1013, 1.0
        %v1015 = vmul.f32 %v1014, %v953
        %v1016 = vand.u32 2147483647, %v953
        %vm1017 = vcmp.lt.f32.partialorder %v1016, 0.0004427343
        %v1018 = vsel %vm1017, %v1015, %v1012
        %v1019 = vadd.f32 %v955, 1.0
        %v1020 = vlog2.pop %v1019
        %v1021 = vmul.f32 %v1020, 0.6931472
        %v1022 = vmul.f32 -0.5, %v955
        %v1023 = vadd.f32 %v1022, 1.0
        %v1024 = vmul.f32 %v1023, %v955
        %v1025 = vand.u32 2147483647, %v955
        %vm1026 = vcmp.lt.f32.partialorder %v1025, 0.0004427343
        %v1027 = vsel %vm1026, %v1024, %v1021
        %v1028 = vmax.f32 %v894, 0.0
        %v1029 = vmax.f32 %v897, 0.0
        %v1030 = vmax.f32 %v902, 0.0
        %v1031 = vmax.f32 %v905, 0.0
        %v1032 = vmax.f32 %v910, 0.0
        %v1033 = vmax.f32 %v913, 0.0
        %v1034 = vmax.f32 %v918, 0.0
        %v1035 = vmax.f32 %v921, 0.0
        %v1036 = vadd.f32 %v964, %v1028
        %v1037 = vadd.f32 %v973, %v1029
        %v1038 = vadd.f32 %v982, %v1030
        %v1039 = vadd.f32 %v991, %v1031
        %v1040 = vadd.f32 %v1000, %v1032
        %v1041 = vadd.f32 %v1009, %v1033
        %v1042 = vadd.f32 %v1018, %v1034
        %v1043 = vadd.f32 %v1027, %v1035
        %v1044 = vtanh.pop %v1036
        %v1045 = vtanh.pop %v1037
        %v1046 = vtanh.pop %v1038
        %v1047 = vtanh.pop %v1039
        %v1048 = vtanh.pop %v1040
        %v1049 = vtanh.pop %v1041
        %v1050 = vtanh.pop %v1042
        %v1051 = vtanh.pop %v1043
        %v1052 = vmul.f32 %v894, %v1044
        %v1053 = vmul.f32 %v897, %v1045
        %v1054 = vmul.f32 %v902, %v1046
        %v1055 = vmul.f32 %v905, %v1047
        %v1056 = vmul.f32 %v910, %v1048
        %v1057 = vmul.f32 %v913, %v1049
        %v1058 = vmul.f32 %v918, %v1050
        %v1059 = vmul.f32 %v921, %v1051
        %1060 = vst.msk [vmem:[%s166] sm:$0xff] %vm734, %v1052
        %1061 = vst.msk [vmem:[%s166 + $0x8] sm:$0xff] %vm734, %v1053
        %1062 = vst.msk [vmem:[%s166 + $0x10] sm:$0xff] %vm734, %v1054
        %1063 = vst.msk [vmem:[%s166 + $0x18] sm:$0xff] %vm734, %v1055
        %1064 = vst.msk [vmem:[%s166 + $0x20] sm:$0xff] %vm734, %v1056
        %1065 = vst.msk [vmem:[%s166 + $0x28] sm:$0xff] %vm734, %v1057
        %1066 = vst.msk [vmem:[%s166 + $0x30] sm:$0xff] %vm734, %v1058
        %1067 = vst.msk [vmem:[%s166 + $0x38] sm:$0xff] %vm734, %v1059
        %s1068 = sand.u32 %s93, 1
        %s1069 = scalar_lea.sflag [#allocation3], %s1068
        %s1070 = sand.u32 %s93, 1
        %s1071 = smul.addr %s1070, 64
        %s1072 = scalar_lea.vmem [#allocation2], %s1071
        // Predicated region
        $region33: #{tpu_custom_call.1} parent=31 // pred_check
          %p1073 = pneg %p103
        $region34: #{tpu_custom_call.1} parent=31 // pred_check_branch
          %1075 = sbr.rel (%p1073) target = $region36
        $region35: #{tpu_custom_call.1} parent=31 // pred_region
          %s1076 = smul.u32 4, %s17
          %s1078 = ssub.s32 1024, 1024
          %1079 = vsyncadd %s1069, %s1078
          %s1080 = smul.addr %s1076, 2
          %s1081 = smul.addr %s1080, 128
          %s1082 = scalar_lea.hbm %s3, %s1081
          %s1083 = sshll.u32 %s1072, 4
          %s1084 = int_to_ptr.vmem [resolvable:$true] %s1083
          %1089 = dma.vmem_to_hbm [thread:$0]  %s1084, 1024, %s1082, %s1069, 128, 128, 8
        $region36: #{tpu_custom_call.1} parent=31 // pred_fallthru
          _
      $region32: #{tpu_custom_call.1} parent=5 // pred_fallthru
        _
      %p1090 = scmp.le.s32.totalorder 2, %s12
      // Predicated region
      $region37: #{tpu_custom_call.1} parent=5 // pred_check
        %p1091 = pneg %p1090
      $region38: #{tpu_custom_call.1} parent=5 // pred_check_branch
        %1093 = sbr.rel (%p1091) target = $region40
      $region39: #{tpu_custom_call.1} parent=5 // pred_region
        %s1094 = ssub.s32 %s12, 2
        // Predicated region
        $region41: #{tpu_custom_call.1} parent=39 // pred_check
          %p1095 = pneg %p109
        $region42: #{tpu_custom_call.1} parent=39 // pred_check_branch
          %1097 = sbr.rel (%p1095) target = $region44
        $region43: #{tpu_custom_call.1} parent=39 // pred_region
          %s1098 = sand.u32 %s94, 1
          %s1099 = scalar_lea.sflag [#allocation3], %s1098
          %s1100 = sand.u32 %s94, 1
          %s1101 = smul.addr %s1100, 64
          %s1102 = scalar_lea.vmem [#allocation2], %s1101
          %1103 = dma.done %s1099, 1024
        $region44: #{tpu_custom_call.1} parent=39 // pred_fallthru
          _
      $region40: #{tpu_custom_call.1} parent=5 // pred_fallthru
        _
    $region6: #{tpu_custom_call.1} parent=1 // loop_footer
      %s16 = sadd.s32 1, %s12
    $region7: #{tpu_custom_call.1} parent=1 // loop_footer_branch
      %11 = sbr.rel target = $region3
    $region8: #{tpu_custom_call.1} parent=1 // loop_exit
      _
    %1104 = vsyncpa [#allocation3], 1
    %s1105 = scalar_lea.sflag [#allocation3], 1
    %1106 = vsyncpa %s1105, 1

</llo_original>
